<compile_context>
chip_gen: v5e
topology: v5e:2x2
jax: 0.10.0
libtpu: 0.0.40
codegen_flags: <defaults>
</compile_context>

<pallas_src>
import jax
import jax.numpy as jnp
from jax.experimental import pallas as pl
from jax.experimental.pallas import tpu as pltpu

# Quantization constants (from ModelWithFakeQuant.__init__)
INPUT_SCALE = 1.0
INPUT_INV_SCALE = 1.0 / INPUT_SCALE
INPUT_ZP = 25.0
INPUT_QMIN = 0.0
INPUT_QMAX = 255.0
W_QMIN = -128.0
W_QMAX = 127.0


def _make_kernel(c_in, img_w, kh_sz, kw_sz, oc_pad, m_out):
    taps = [(kh, kw) for kh in range(kh_sz) for kw in range(kw_sz)]

    def kernel(x_ref, w_ref, params_ref, o_ref, xi_ref):
        # x_ref:      (C, Lpad)        f32 raw input, columns = flat (n, h, w), zero tail pad
        # w_ref:      (OCp, K)         f32 weight rows ordered (kh, kw, c); zero pad rows
        # params_ref: (OCp, 3)         f32 packed [1/w_scale, w_zero_point, w_scale*input_scale]
        # o_ref:      (OCp, m_out)     f32 lane-dense output slab (m_out % 128 == 0)
        # xi_ref:     (C, Lpad)        f32 scratch: fake-quantized integer input

        # ---- fake_quantize_per_tensor_affine on the RAW input, once (PyTorch order) ----
        x = x_ref[...]
        xq = jnp.clip(jnp.round(x * INPUT_INV_SCALE + INPUT_ZP), INPUT_QMIN, INPUT_QMAX)
        xi_ref[...] = xq - INPUT_ZP                       # exact integers in [-25, 230]

        # ---- fake_quantize_per_channel_affine on the weight (axis=0), once ----
        params = params_ref[...]
        inv_ws = params[:, 0:1]                           # (OCp, 1)
        wzp = params[:, 1:2]                              # (OCp, 1) integer-valued
        oscale = params[:, 2:3]                           # (OCp, 1) w_scale * input_scale
        w = w_ref[...]
        wq = jnp.clip(jnp.round(w * inv_ws + wzp), W_QMIN, W_QMAX)
        w_int = wq - wzp                                  # exact integers, |v| <= 255 (f32)

        # ---- KH*KW accumulating taps on the MXU: (OCp, C) x (C, m_out), f32 accumulate ----
        # Column m corresponds to flat position (n, h, w); tap (kh, kw) reads the
        # quantized input at flat offset m + kh*W + kw (static lane offset).
        acc = jnp.zeros((oc_pad, m_out), jnp.float32)
        for idx, (kh, kw) in enumerate(taps):
            off = kh * img_w + kw
            x_tap = xi_ref[:, pl.ds(off, m_out)].astype(jnp.bfloat16)      # (C, m_out)
            w_tap = w_int[:, idx * c_in:(idx + 1) * c_in].astype(jnp.bfloat16)  # (OCp, C)
            acc = acc + jax.lax.dot_general(
                w_tap, x_tap,
                dimension_numbers=(((1,), (0,)), ((), ())),
                preferred_element_type=jnp.float32)

        # Per-output-channel dequant scale applied in f32 after the matmul.
        o_ref[...] = (acc * oscale).astype(o_ref.dtype)

    return kernel


def model_with_fake_quant(x, weight, weight_scale, weight_zero_point):
    """x: (N, C, H, W) f32; weight: (OC, C, KH, KW) f32; scale/zp: (OC,)."""
    n, c, h, w = x.shape
    oc, _, kh_sz, kw_sz = weight.shape
    oh, ow = h - kh_sz + 1, w - kw_sz + 1
    k = kh_sz * kw_sz * c
    oc_pad = pl.cdiv(oc, 8) * 8                      # full 8-sublane output rows

    # Output columns are flat (n, h, w) positions; only (h < OH, w < OW) columns
    # are real conv outputs, the rest are discarded below. m_out is a multiple
    # of 128 so every kernel vreg / output store is full and unmasked.
    m_valid = n * h * w
    m_out = pl.cdiv(m_valid, 128) * 128
    max_off = (kh_sz - 1) * w + (kw_sz - 1)
    l_pad = pl.cdiv(m_out + max_off, 128) * 128      # every tap window stays in-bounds

    # ---- wrapper-side layout plumbing only (no compute, no 9x expansion) ----
    x_flat = x.astype(jnp.float32).transpose(1, 0, 2, 3).reshape(c, m_valid)
    x_flat = jnp.pad(x_flat, ((0, 0), (0, l_pad - m_valid)))

    # Weight rows ordered (kh, kw, c) so each tap is a contiguous C-column slice.
    w2d = weight.astype(jnp.float32).transpose(0, 2, 3, 1).reshape(oc, k)
    w2d = jnp.pad(w2d, ((0, oc_pad - oc), (0, 0)))

    ws = weight_scale.astype(jnp.float32)
    wzp = jnp.round(weight_zero_point.astype(jnp.float32))   # PyTorch zero points are ints
    params = jnp.stack([1.0 / ws, wzp, ws * INPUT_SCALE], axis=1)   # (OC, 3) packed
    params = jnp.pad(params, ((0, oc_pad - oc), (0, 0)))            # pad rows -> all-zero

    kernel = _make_kernel(c, w, kh_sz, kw_sz, oc_pad, m_out)
    out2d = pl.pallas_call(
        kernel,
        out_shape=jax.ShapeDtypeStruct((oc_pad, m_out), jnp.float32),
        in_specs=[
            pl.BlockSpec((c, l_pad), lambda: (0, 0)),
            pl.BlockSpec((oc_pad, k), lambda: (0, 0)),
            pl.BlockSpec((oc_pad, 3), lambda: (0, 0)),
        ],
        out_specs=pl.BlockSpec((oc_pad, m_out), lambda: (0, 0)),
        scratch_shapes=[pltpu.VMEM((c, l_pad), jnp.float32)],
    )(x_flat, w2d, params)

    # Strip OC/column padding and restore NCHW (layout only).
    out = out2d[:oc, :m_valid].reshape(oc, n, h, w)
    return out[:, :, :oh, :ow].transpose(1, 0, 2, 3).astype(x.dtype)


def _reference(x, weight, weight_scale, weight_zero_point):
    # Pure-JAX reference (PyTorch fake-quant semantics, inv-scale multiply).
    xq = jnp.clip(jnp.round(x * INPUT_INV_SCALE + INPUT_ZP), INPUT_QMIN, INPUT_QMAX)
    x_fq = (xq - INPUT_ZP) * INPUT_SCALE
    s = weight_scale.reshape(-1, 1, 1, 1)
    z = jnp.round(weight_zero_point).reshape(-1, 1, 1, 1)
    wq = jnp.clip(jnp.round(weight * (1.0 / s) + z), W_QMIN, W_QMAX)
    w_fq = (wq - z) * s
    return jax.lax.conv_general_dilated(
        x_fq, w_fq, window_strides=(1, 1), padding="VALID",
        dimension_numbers=("NCHW", "OIHW", "NCHW"),
        precision=jax.lax.Precision.HIGHEST)


if __name__ == "__main__":
    key = jax.random.PRNGKey(0)
    kx, kw_, ks = jax.random.split(key, 3)

    # Module __init__ shapes: weight (3,4,3,3), per-channel scale/zp (3,)
    N, C, H, W = 2, 4, 16, 16
    x = jax.random.normal(kx, (N, C, H, W), dtype=jnp.float32)
    weight = jax.random.normal(kw_, (3, 4, 3, 3), dtype=jnp.float32)
    # Positive, bounded-away-from-zero scales keep the round/clip comparison
    # against the f32 reference numerically stable (module init is randn, but
    # near-zero scales make any fake-quant comparison fragile).
    weight_scale = jnp.abs(jax.random.normal(ks, (3,), dtype=jnp.float32)) + 0.1
    weight_zero_point = jnp.zeros((3,), dtype=jnp.float32)

    y = model_with_fake_quant(x, weight, weight_scale, weight_zero_point)
    y = jax.block_until_ready(y)

    y_ref = _reference(x, weight, weight_scale, weight_zero_point)
    assert y.shape == (N, 3, H - 2, W - 2), y.shape
    assert jnp.allclose(y, y_ref, rtol=1e-4, atol=1e-3), float(jnp.max(jnp.abs(y - y_ref)))

    print("KERNEL_OK")
</pallas_src>

<mosaic_0001>
module attributes {stable_mosaic.version = 11 : i64} {
  func.func @kernel(%arg0: memref<4x640xf32, #tpu.memory_space<vmem>>, %arg1: memref<8x36xf32, #tpu.memory_space<vmem>>, %arg2: memref<8x3xf32, #tpu.memory_space<vmem>>, %arg3: memref<8x512xf32, #tpu.memory_space<vmem>>, %arg4: memref<4x640xf32, #tpu.memory_space<vmem>>) attributes {dimension_semantics = [], scalar_prefetch = 0 : i64, scratch_operands = 1 : i64, tpu.core_type = #tpu.core_type<tc>} {
    %c0 = arith.constant 0 : index
    %c0_0 = arith.constant 0 : index
    %0 = vector.load %arg0[%c0, %c0_0] : memref<4x640xf32, #tpu.memory_space<vmem>>, vector<4x640xf32>
    %cst = arith.constant 1.000000e+00 : f32
    %1 = vector.broadcast %cst : f32 to vector<4x640xf32>
    %2 = arith.mulf %0, %1 : vector<4x640xf32>
    %cst_1 = arith.constant 2.500000e+01 : f32
    %3 = vector.broadcast %cst_1 : f32 to vector<4x640xf32>
    %4 = arith.addf %2, %3 : vector<4x640xf32>
    %5 = math.roundeven %4 : vector<4x640xf32>
    %cst_2 = arith.constant 0.000000e+00 : f32
    %cst_3 = arith.constant 2.550000e+02 : f32
    %6 = vector.broadcast %cst_2 : f32 to vector<4x640xf32>
    %7 = arith.maximumf %6, %5 : vector<4x640xf32>
    %8 = vector.broadcast %cst_3 : f32 to vector<4x640xf32>
    %9 = arith.minimumf %8, %7 : vector<4x640xf32>
    %cst_4 = arith.constant 2.500000e+01 : f32
    %10 = vector.broadcast %cst_4 : f32 to vector<4x640xf32>
    %11 = arith.subf %9, %10 : vector<4x640xf32>
    %c0_5 = arith.constant 0 : index
    %c0_6 = arith.constant 0 : index
    %12 = vector.load %arg4[%c0_5, %c0_6] : memref<4x640xf32, #tpu.memory_space<vmem>>, vector<4x640xf32>
    tpu.vector_store %arg4[%c0_5, %c0_6], %11 {strides = array<i32>} : memref<4x640xf32, #tpu.memory_space<vmem>>, vector<4x640xf32>,
    %c0_7 = arith.constant 0 : index
    %c0_8 = arith.constant 0 : index
    %13 = vector.load %arg2[%c0_7, %c0_8] : memref<8x3xf32, #tpu.memory_space<vmem>>, vector<8x3xf32>
    %14 = vector.extract_strided_slice %13 {offsets = [0, 0], sizes = [8, 1], strides = [1, 1]} : vector<8x3xf32> to vector<8x1xf32>
    %15 = vector.extract_strided_slice %13 {offsets = [0, 1], sizes = [8, 1], strides = [1, 1]} : vector<8x3xf32> to vector<8x1xf32>
    %16 = vector.extract_strided_slice %13 {offsets = [0, 2], sizes = [8, 1], strides = [1, 1]} : vector<8x3xf32> to vector<8x1xf32>
    %c0_9 = arith.constant 0 : index
    %c0_10 = arith.constant 0 : index
    %17 = vector.load %arg1[%c0_9, %c0_10] : memref<8x36xf32, #tpu.memory_space<vmem>>, vector<8x36xf32>
    %18 = vector.broadcast %14 : vector<8x1xf32> to vector<8x36xf32>
    %19 = arith.mulf %17, %18 : vector<8x36xf32>
    %20 = vector.broadcast %15 : vector<8x1xf32> to vector<8x36xf32>
    %21 = arith.addf %19, %20 : vector<8x36xf32>
    %22 = math.roundeven %21 : vector<8x36xf32>
    %cst_11 = arith.constant -1.280000e+02 : f32
    %cst_12 = arith.constant 1.270000e+02 : f32
    %23 = vector.broadcast %cst_11 : f32 to vector<8x36xf32>
    %24 = arith.maximumf %23, %22 : vector<8x36xf32>
    %25 = vector.broadcast %cst_12 : f32 to vector<8x36xf32>
    %26 = arith.minimumf %25, %24 : vector<8x36xf32>
    %27 = vector.broadcast %15 : vector<8x1xf32> to vector<8x36xf32>
    %28 = arith.subf %26, %27 : vector<8x36xf32>
    %cst_13 = arith.constant 0.000000e+00 : f32
    %29 = vector.broadcast %cst_13 : f32 to vector<8x512xf32>
    %c0_14 = arith.constant 0 : index
    %c0_15 = arith.constant 0 : index
    %30 = vector.load %arg4[%c0_14, %c0_15] : memref<4x640xf32, #tpu.memory_space<vmem>>, vector<4x512xf32>
    %31 = arith.truncf %30 : vector<4x512xf32> to vector<4x512xbf16>
    %32 = vector.extract_strided_slice %28 {offsets = [0, 0], sizes = [8, 4], strides = [1, 1]} : vector<8x36xf32> to vector<8x4xf32>
    %33 = arith.truncf %32 : vector<8x4xf32> to vector<8x4xbf16>
    %cst_16 = arith.constant dense<0.000000e+00> : vector<8x512xf32>
    %34 = tpu.matmul %33, %31, %cst_16 {dimension_numbers = #tpu.dot_dimension_numbers<[1], [0], [0], [1], [0, 0, 1, 1], [], []>} : vector<8x4xbf16>, vector<4x512xbf16>, vector<8x512xf32> -> vector<8x512xf32>
    %35 = arith.addf %29, %34 : vector<8x512xf32>
    %c0_17 = arith.constant 0 : index
    %c1 = arith.constant 1 : index
    %36 = vector.load %arg4[%c0_17, %c1] : memref<4x640xf32, #tpu.memory_space<vmem>>, vector<4x512xf32>
    %37 = arith.truncf %36 : vector<4x512xf32> to vector<4x512xbf16>
    %38 = vector.extract_strided_slice %28 {offsets = [0, 4], sizes = [8, 4], strides = [1, 1]} : vector<8x36xf32> to vector<8x4xf32>
    %39 = arith.truncf %38 : vector<8x4xf32> to vector<8x4xbf16>
    %cst_18 = arith.constant dense<0.000000e+00> : vector<8x512xf32>
    %40 = tpu.matmul %39, %37, %cst_18 {dimension_numbers = #tpu.dot_dimension_numbers<[1], [0], [0], [1], [0, 0, 1, 1], [], []>} : vector<8x4xbf16>, vector<4x512xbf16>, vector<8x512xf32> -> vector<8x512xf32>
    %41 = arith.addf %35, %40 : vector<8x512xf32>
    %c0_19 = arith.constant 0 : index
    %c2 = arith.constant 2 : index
    %42 = vector.load %arg4[%c0_19, %c2] : memref<4x640xf32, #tpu.memory_space<vmem>>, vector<4x512xf32>
    %43 = arith.truncf %42 : vector<4x512xf32> to vector<4x512xbf16>
    %44 = vector.extract_strided_slice %28 {offsets = [0, 8], sizes = [8, 4], strides = [1, 1]} : vector<8x36xf32> to vector<8x4xf32>
    %45 = arith.truncf %44 : vector<8x4xf32> to vector<8x4xbf16>
    %cst_20 = arith.constant dense<0.000000e+00> : vector<8x512xf32>
    %46 = tpu.matmul %45, %43, %cst_20 {dimension_numbers = #tpu.dot_dimension_numbers<[1], [0], [0], [1], [0, 0, 1, 1], [], []>} : vector<8x4xbf16>, vector<4x512xbf16>, vector<8x512xf32> -> vector<8x512xf32>
    %47 = arith.addf %41, %46 : vector<8x512xf32>
    %c0_21 = arith.constant 0 : index
    %c16 = arith.constant 16 : index
    %48 = vector.load %arg4[%c0_21, %c16] : memref<4x640xf32, #tpu.memory_space<vmem>>, vector<4x512xf32>
    %49 = arith.truncf %48 : vector<4x512xf32> to vector<4x512xbf16>
    %50 = vector.extract_strided_slice %28 {offsets = [0, 12], sizes = [8, 4], strides = [1, 1]} : vector<8x36xf32> to vector<8x4xf32>
    %51 = arith.truncf %50 : vector<8x4xf32> to vector<8x4xbf16>
    %cst_22 = arith.constant dense<0.000000e+00> : vector<8x512xf32>
    %52 = tpu.matmul %51, %49, %cst_22 {dimension_numbers = #tpu.dot_dimension_numbers<[1], [0], [0], [1], [0, 0, 1, 1], [], []>} : vector<8x4xbf16>, vector<4x512xbf16>, vector<8x512xf32> -> vector<8x512xf32>
    %53 = arith.addf %47, %52 : vector<8x512xf32>
    %c0_23 = arith.constant 0 : index
    %c17 = arith.constant 17 : index
    %54 = vector.load %arg4[%c0_23, %c17] : memref<4x640xf32, #tpu.memory_space<vmem>>, vector<4x512xf32>
    %55 = arith.truncf %54 : vector<4x512xf32> to vector<4x512xbf16>
    %56 = vector.extract_strided_slice %28 {offsets = [0, 16], sizes = [8, 4], strides = [1, 1]} : vector<8x36xf32> to vector<8x4xf32>
    %57 = arith.truncf %56 : vector<8x4xf32> to vector<8x4xbf16>
    %cst_24 = arith.constant dense<0.000000e+00> : vector<8x512xf32>
    %58 = tpu.matmul %57, %55, %cst_24 {dimension_numbers = #tpu.dot_dimension_numbers<[1], [0], [0], [1], [0, 0, 1, 1], [], []>} : vector<8x4xbf16>, vector<4x512xbf16>, vector<8x512xf32> -> vector<8x512xf32>
    %59 = arith.addf %53, %58 : vector<8x512xf32>
    %c0_25 = arith.constant 0 : index
    %c18 = arith.constant 18 : index
    %60 = vector.load %arg4[%c0_25, %c18] : memref<4x640xf32, #tpu.memory_space<vmem>>, vector<4x512xf32>
    %61 = arith.truncf %60 : vector<4x512xf32> to vector<4x512xbf16>
    %62 = vector.extract_strided_slice %28 {offsets = [0, 20], sizes = [8, 4], strides = [1, 1]} : vector<8x36xf32> to vector<8x4xf32>
    %63 = arith.truncf %62 : vector<8x4xf32> to vector<8x4xbf16>
    %cst_26 = arith.constant dense<0.000000e+00> : vector<8x512xf32>
    %64 = tpu.matmul %63, %61, %cst_26 {dimension_numbers = #tpu.dot_dimension_numbers<[1], [0], [0], [1], [0, 0, 1, 1], [], []>} : vector<8x4xbf16>, vector<4x512xbf16>, vector<8x512xf32> -> vector<8x512xf32>
    %65 = arith.addf %59, %64 : vector<8x512xf32>
    %c0_27 = arith.constant 0 : index
    %c32 = arith.constant 32 : index
    %66 = vector.load %arg4[%c0_27, %c32] : memref<4x640xf32, #tpu.memory_space<vmem>>, vector<4x512xf32>
    %67 = arith.truncf %66 : vector<4x512xf32> to vector<4x512xbf16>
    %68 = vector.extract_strided_slice %28 {offsets = [0, 24], sizes = [8, 4], strides = [1, 1]} : vector<8x36xf32> to vector<8x4xf32>
    %69 = arith.truncf %68 : vector<8x4xf32> to vector<8x4xbf16>
    %cst_28 = arith.constant dense<0.000000e+00> : vector<8x512xf32>
    %70 = tpu.matmul %69, %67, %cst_28 {dimension_numbers = #tpu.dot_dimension_numbers<[1], [0], [0], [1], [0, 0, 1, 1], [], []>} : vector<8x4xbf16>, vector<4x512xbf16>, vector<8x512xf32> -> vector<8x512xf32>
    %71 = arith.addf %65, %70 : vector<8x512xf32>
    %c0_29 = arith.constant 0 : index
    %c33 = arith.constant 33 : index
    %72 = vector.load %arg4[%c0_29, %c33] : memref<4x640xf32, #tpu.memory_space<vmem>>, vector<4x512xf32>
    %73 = arith.truncf %72 : vector<4x512xf32> to vector<4x512xbf16>
    %74 = vector.extract_strided_slice %28 {offsets = [0, 28], sizes = [8, 4], strides = [1, 1]} : vector<8x36xf32> to vector<8x4xf32>
    %75 = arith.truncf %74 : vector<8x4xf32> to vector<8x4xbf16>
    %cst_30 = arith.constant dense<0.000000e+00> : vector<8x512xf32>
    %76 = tpu.matmul %75, %73, %cst_30 {dimension_numbers = #tpu.dot_dimension_numbers<[1], [0], [0], [1], [0, 0, 1, 1], [], []>} : vector<8x4xbf16>, vector<4x512xbf16>, vector<8x512xf32> -> vector<8x512xf32>
    %77 = arith.addf %71, %76 : vector<8x512xf32>
    %c0_31 = arith.constant 0 : index
    %c34 = arith.constant 34 : index
    %78 = vector.load %arg4[%c0_31, %c34] : memref<4x640xf32, #tpu.memory_space<vmem>>, vector<4x512xf32>
    %79 = arith.truncf %78 : vector<4x512xf32> to vector<4x512xbf16>
    %80 = vector.extract_strided_slice %28 {offsets = [0, 32], sizes = [8, 4], strides = [1, 1]} : vector<8x36xf32> to vector<8x4xf32>
    %81 = arith.truncf %80 : vector<8x4xf32> to vector<8x4xbf16>
    %cst_32 = arith.constant dense<0.000000e+00> : vector<8x512xf32>
    %82 = tpu.matmul %81, %79, %cst_32 {dimension_numbers = #tpu.dot_dimension_numbers<[1], [0], [0], [1], [0, 0, 1, 1], [], []>} : vector<8x4xbf16>, vector<4x512xbf16>, vector<8x512xf32> -> vector<8x512xf32>
    %83 = arith.addf %77, %82 : vector<8x512xf32>
    %84 = vector.broadcast %16 : vector<8x1xf32> to vector<8x512xf32>
    %85 = arith.mulf %83, %84 : vector<8x512xf32>
    %c0_33 = arith.constant 0 : index
    %c0_34 = arith.constant 0 : index
    %86 = vector.load %arg3[%c0_33, %c0_34] : memref<8x512xf32, #tpu.memory_space<vmem>>, vector<8x512xf32>
    tpu.vector_store %arg3[%c0_33, %c0_34], %85 {strides = array<i32>} : memref<8x512xf32, #tpu.memory_space<vmem>>, vector<8x512xf32>,
    return
  }
}

</mosaic_0001>

<llo_original>
// kernel: tpu_custom_call.1
$region0: #{tpu_custom_call.1}
  #allocation0 [shape = 'u32[]', space=smem, size = 0x4, offset = 0x4, fixed_abs, tag = 'smem constant byte address 0x4 - core index']
  #allocation1 [shape = 'u32[72,128]{1,0:T(1,128)}', space=vmem, size = 0x9000, scoped, tag = 'internal scratch']
  #allocation2 [shape = 'f32[4,640]{1,0:T(4,128)}', space=vmem, size = 0x2800, scoped, tag = 'scratch operand']
  %s0 = inlined_call_operand.hbm [shape: f32[4,640], index: 0, kind: input, shape index: {}]
  %s1 = inlined_call_operand.vmem [shape: f32[8,36], index: 1, kind: input, shape index: {}]
  %s2 = inlined_call_operand.vmem [shape: f32[8,3], index: 2, kind: input, shape index: {}]
  %s3 = inlined_call_operand.hbm [shape: f32[8,512], index: 3, kind: output, shape index: {}]
  %s4 = sld [smem:[#allocation0]]
  $region26: #{tpu_custom_call.1} parent=0
    _
  %s6 = ssub.s32 1, %s4
  %s7 = scalar_select 0, %s6, %s4
  $region1: #{tpu_custom_call.1} parent=0
    #allocation3 [shape = 'u8[10240]{0}', space=vmem, size = 0x2800, scoped, tag = 'input window, operand 0, single buffered']
    #allocation4 [shape = 's32[1]{0}', space=sflag, size = 0x4, scoped, tag = 'scoped memory for tpu_custom_call.1']
    #allocation5 [shape = 's32[1]{0}', space=sflag, size = 0x4, scoped, tag = 'scoped memory for tpu_custom_call.1']
    #allocation6 [shape = 'u8[16384]{0}', space=vmem, size = 0x4000, scoped, tag = 'output window, operand 0, single buffered']
    %8 = vsyncpa [#allocation4], 0
    %9 = vsyncpa [#allocation5], 0
    // Predicated region
    $region2: #{tpu_custom_call.1} parent=1 // pred_check
      _
    $region3: #{tpu_custom_call.1} parent=1 // pred_check_branch
      %11 = sbr.rel (0) target = $region5
    $region4: #{tpu_custom_call.1} parent=1 // pred_region
      %13 = vsyncadd [#allocation4], 0
      %s15 = sshll.u32 %s0, 4
      %s16 = int_to_ptr.hbm [resolvable:$true] %s15
      %s17 = sshll.u32 [#allocation3], 4
      %s18 = int_to_ptr.vmem [resolvable:$true] %s17
      %20 = dma.hbm_to_vmem [thread:$0]  %s16, 320, %s18, [#allocation4]
    $region5: #{tpu_custom_call.1} parent=1 // pred_fallthru
      _
    // Predicated region
    $region6: #{tpu_custom_call.1} parent=1 // pred_check
      _
    $region7: #{tpu_custom_call.1} parent=1 // pred_check_branch
      %22 = sbr.rel (0) target = $region9
    $region8: #{tpu_custom_call.1} parent=1 // pred_region
      _
    $region9: #{tpu_custom_call.1} parent=1 // pred_fallthru
      _
    // Predicated region
    $region10: #{tpu_custom_call.1} parent=1 // pred_check
      _
    $region11: #{tpu_custom_call.1} parent=1 // pred_check_branch
      %24 = sbr.rel (0) target = $region13
    $region12: #{tpu_custom_call.1} parent=1 // pred_region
      _
    $region13: #{tpu_custom_call.1} parent=1 // pred_fallthru
      _
    // Predicated region
    $region14: #{tpu_custom_call.1} parent=1 // pred_check
      _
    $region15: #{tpu_custom_call.1} parent=1 // pred_check_branch
      %26 = sbr.rel (0) target = $region17
    $region16: #{tpu_custom_call.1} parent=1 // pred_region
      %28 = dma.done [#allocation4], 320
    $region17: #{tpu_custom_call.1} parent=1 // pred_fallthru
      _
    %v30 = vld [vmem:[#allocation3] sm:$0xff]
    %v31 = vld [vmem:[#allocation3 + $0x8] sm:$0xff]
    %v32 = vld [vmem:[#allocation3 + $0x10] sm:$0xf]
    %v33 = vadd.f32 %v30, 25.0
    %v34 = vadd.f32 %v31, 25.0
    %v35 = vadd.f32 %v32, 25.0
    %v36 = vround.ne.pseudo %v33
    %v37 = vround.ne.pseudo %v34
    %v38 = vround.ne.pseudo %v35
    %v39 = vmax.f32 %v36, 0.0
    %v40 = vmax.f32 %v37, 0.0
    %v41 = vmax.f32 %v38, 0.0
    %v42 = vmin.f32 %v39, 255.0
    %v43 = vmin.f32 %v40, 255.0
    %v44 = vmin.f32 %v41, 255.0
    %v45 = vsub.f32 %v42, 25.0
    %v46 = vsub.f32 %v43, 25.0
    %v47 = vsub.f32 %v44, 25.0
    %48 = vst [vmem:[#allocation2] sm:$0xff] %v45
    %49 = vst [vmem:[#allocation2 + $0x8] sm:$0xff] %v46
    %50 = vst [vmem:[#allocation2 + $0x10] sm:$0xf] %v47
    %v51 = vld [vmem:[%s2] sm:$0xff]
    %v52 = vld [vmem:[%s1] sm:$0xff]
    %54 = vset.pattern.permute.xlu0 0
    %55 = vperm.xlu0 %54, %v51
    %v56 = vpop.permute.xlu0 %55
    %v58 = vmul.f32 %v52, %v56
    %59 = vset.pattern.permute.xlu0 1
    %60 = vperm.xlu0 %59, %v51
    %v61 = vpop.permute.xlu0 %60
    %v63 = vadd.f32 %v58, %v61
    %v64 = vround.ne.pseudo %v63
    %v65 = vmax.f32 %v64, -128.0
    %v66 = vmin.f32 %v65, 127.0
    %v67 = vsub.f32 %v66, %v61
    %v68 = vld [vmem:[#allocation2] sm:$0xff]
    %v69 = vld [vmem:[#allocation2 + $0x8] sm:$0xff]
    %72 = vst [vmem:[#allocation1] ss:$2 sm:$0xff] %v68
    %s73 = scalar_lea.vmem [#allocation1], 16
    %74 = vst [vmem:[%s73] ss:$2 sm:$0xff] %v69
    %v75 = vld.sshfl [vmem:[#allocation1] sm:$0xff pattern:$0x75316420]
    %v76 = vld.sshfl [vmem:[#allocation1 + $0x8] sm:$0xff pattern:$0x75316420]
    %v77 = vld.sshfl [vmem:[#allocation1 + $0x10] sm:$0xff pattern:$0x75316420]
    %v78 = vld.sshfl [vmem:[#allocation1 + $0x18] sm:$0xff pattern:$0x75316420]
    %v83 = vpack.c.bf16 %v75, %v75
    %v84 = vpack.c.bf16 %v76, %v76
    %v85 = vpack.c.bf16 %v77, %v77
    %v86 = vpack.c.bf16 %v78, %v78
    %v87 = vpack.c.bf16 %v67, %v67
    %v88 = vld [vmem:[#allocation2] sm:$0xff]
    %v89 = vld [vmem:[#allocation2 + $0x8] sm:$0xff]
    %v90 = vld [vmem:[#allocation2 + $0x10] sm:$0xf]
    %94 = vst [vmem:[#allocation1] ss:$2 sm:$0xff] %v88
    %s95 = scalar_lea.vmem [#allocation1], 16
    %96 = vst [vmem:[%s95] ss:$2 sm:$0xff] %v89
    %s97 = scalar_lea.vmem [#allocation1], 32
    %98 = vst [vmem:[%s97] ss:$2 sm:$0xff] %v90
    %v99 = vld.sshfl [vmem:[#allocation1] sm:$0xff pattern:$0x75316420]
    %v100 = vld.sshfl [vmem:[#allocation1 + $0x8] sm:$0xff pattern:$0x75316420]
    %v101 = vld.sshfl [vmem:[#allocation1 + $0x10] sm:$0xff pattern:$0x75316420]
    %v102 = vld.sshfl [vmem:[#allocation1 + $0x18] sm:$0xff pattern:$0x75316420]
    %v103 = vld.sshfl [vmem:[#allocation1 + $0x20] sm:$0xff pattern:$0x75316420]
    %v109 = vpack.c.bf16 %v99, %v99
    %v110 = vpack.c.bf16 %v100, %v100
    %v111 = vpack.c.bf16 %v101, %v101
    %v112 = vpack.c.bf16 %v102, %v102
    %v113 = vpack.c.bf16 %v103, %v103
    %115 = vrot.lane.b32.xlu0 %v87, 124
    %v116 = vpop.permute.xlu0 %115
    %122 = vrot.lane.b32.xlu0 %v109, 127
    %v123 = vpop.permute.xlu0 %122
    %124 = vrot.lane.b32.xlu0 %v110, 127
    %v125 = vpop.permute.xlu0 %124
    %126 = vrot.lane.b32.xlu0 %v111, 127
    %v127 = vpop.permute.xlu0 %126
    %128 = vrot.lane.b32.xlu0 %v112, 127
    %v129 = vpop.permute.xlu0 %128
    %130 = vrot.lane.b32.xlu0 %v113, 127
    %v131 = vpop.permute.xlu0 %130
    %vm132 = vcmask 1039360
    %v133 = vsel %vm132, %v123, %v125
    %v134 = vsel %vm132, %v125, %v127
    %v135 = vsel %vm132, %v127, %v129
    %v136 = vsel %vm132, %v129, %v131
    %vm137 = vcmask 31744
    %v139 = vsel %vm137, %v116, 0
    %vm141 = vcmask 1041408
    %v143 = vsel %vm141, %v133, 0
    %v146 = vsel %vm141, %v134, 0
    %v149 = vsel %vm141, %v135, 0
    %v152 = vsel %vm141, %v136, 0
    %154 = vmatpush.bf16.msra.mxu0 0
    %155 = vmatpush.bf16.msra.mxu0 0
    %156 = vmatpush.bf16.msra.mxu0 0
    %157 = vmatpush.bf16.msra.mxu0 0
    %158 = vmatpush.bf16.msra.mxu0 0
    %159 = vmatpush.bf16.msra.mxu0 0
    %160 = vmatpush.bf16.msra.mxu0 0
    %161 = vmatpush.bf16.msra.mxu0 %v143
    %162 = vmatmul.bf16.gmra.mxu0 %v139
    %v163 = vpop.f32.mrf.mxu0
    %v164 = vadd.f32 0.0, %v163
    %v165 = vpop.f32.mrf.mxu0
    %166 = vdwg.mxu0
    %167 = vmatpush.bf16.msra.mxu0 0
    %168 = vmatpush.bf16.msra.mxu0 0
    %169 = vmatpush.bf16.msra.mxu0 0
    %170 = vmatpush.bf16.msra.mxu0 0
    %171 = vmatpush.bf16.msra.mxu0 0
    %172 = vmatpush.bf16.msra.mxu0 0
    %173 = vmatpush.bf16.msra.mxu0 0
    %174 = vmatpush.bf16.msra.mxu0 %v146
    %175 = vmatmul.bf16.gmra.mxu0 %v139
    %v176 = vpop.f32.mrf.mxu0
    %v177 = vadd.f32 0.0, %v176
    %v178 = vpop.f32.mrf.mxu0
    %179 = vdwg.mxu0
    %180 = vmatpush.bf16.msra.mxu0 0
    %181 = vmatpush.bf16.msra.mxu0 0
    %182 = vmatpush.bf16.msra.mxu0 0
    %183 = vmatpush.bf16.msra.mxu0 0
    %184 = vmatpush.bf16.msra.mxu0 0
    %185 = vmatpush.bf16.msra.mxu0 0
    %186 = vmatpush.bf16.msra.mxu0 0
    %187 = vmatpush.bf16.msra.mxu0 %v149
    %188 = vmatmul.bf16.gmra.mxu0 %v139
    %v189 = vpop.f32.mrf.mxu0
    %v190 = vadd.f32 0.0, %v189
    %v191 = vpop.f32.mrf.mxu0
    %192 = vdwg.mxu0
    %193 = vmatpush.bf16.msra.mxu0 0
    %194 = vmatpush.bf16.msra.mxu0 0
    %195 = vmatpush.bf16.msra.mxu0 0
    %196 = vmatpush.bf16.msra.mxu0 0
    %197 = vmatpush.bf16.msra.mxu0 0
    %198 = vmatpush.bf16.msra.mxu0 0
    %199 = vmatpush.bf16.msra.mxu0 0
    %200 = vmatpush.bf16.msra.mxu0 %v152
    %201 = vmatmul.bf16.gmra.mxu0 %v139
    %v202 = vpop.f32.mrf.mxu0
    %v203 = vadd.f32 0.0, %v202
    %v204 = vpop.f32.mrf.mxu0
    %205 = vdwg.mxu0
    %v207 = vsel %vm137, %v87, 0
    %v210 = vsel %vm141, %v83, 0
    %v213 = vsel %vm141, %v84, 0
    %v216 = vsel %vm141, %v85, 0
    %v219 = vsel %vm141, %v86, 0
    %221 = vmatpush.bf16.msra.mxu0 0
    %222 = vmatpush.bf16.msra.mxu0 0
    %223 = vmatpush.bf16.msra.mxu0 0
    %224 = vmatpush.bf16.msra.mxu0 0
    %225 = vmatpush.bf16.msra.mxu0 0
    %226 = vmatpush.bf16.msra.mxu0 0
    %227 = vmatpush.bf16.msra.mxu0 0
    %228 = vmatpush.bf16.msra.mxu0 %v210
    %229 = vmatmul.bf16.gmra.mxu0 %v207
    %v230 = vpop.f32.mrf.mxu0
    %v231 = vadd.f32 %v164, %v230
    %v232 = vpop.f32.mrf.mxu0
    %233 = vdwg.mxu0
    %234 = vmatpush.bf16.msra.mxu0 0
    %235 = vmatpush.bf16.msra.mxu0 0
    %236 = vmatpush.bf16.msra.mxu0 0
    %237 = vmatpush.bf16.msra.mxu0 0
    %238 = vmatpush.bf16.msra.mxu0 0
    %239 = vmatpush.bf16.msra.mxu0 0
    %240 = vmatpush.bf16.msra.mxu0 0
    %241 = vmatpush.bf16.msra.mxu0 %v213
    %242 = vmatmul.bf16.gmra.mxu0 %v207
    %v243 = vpop.f32.mrf.mxu0
    %v244 = vadd.f32 %v177, %v243
    %v245 = vpop.f32.mrf.mxu0
    %246 = vdwg.mxu0
    %247 = vmatpush.bf16.msra.mxu0 0
    %248 = vmatpush.bf16.msra.mxu0 0
    %249 = vmatpush.bf16.msra.mxu0 0
    %250 = vmatpush.bf16.msra.mxu0 0
    %251 = vmatpush.bf16.msra.mxu0 0
    %252 = vmatpush.bf16.msra.mxu0 0
    %253 = vmatpush.bf16.msra.mxu0 0
    %254 = vmatpush.bf16.msra.mxu0 %v216
    %255 = vmatmul.bf16.gmra.mxu0 %v207
    %v256 = vpop.f32.mrf.mxu0
    %v257 = vadd.f32 %v190, %v256
    %v258 = vpop.f32.mrf.mxu0
    %259 = vdwg.mxu0
    %260 = vmatpush.bf16.msra.mxu0 0
    %261 = vmatpush.bf16.msra.mxu0 0
    %262 = vmatpush.bf16.msra.mxu0 0
    %263 = vmatpush.bf16.msra.mxu0 0
    %264 = vmatpush.bf16.msra.mxu0 0
    %265 = vmatpush.bf16.msra.mxu0 0
    %266 = vmatpush.bf16.msra.mxu0 0
    %267 = vmatpush.bf16.msra.mxu0 %v219
    %268 = vmatmul.bf16.gmra.mxu0 %v207
    %v269 = vpop.f32.mrf.mxu0
    %v270 = vadd.f32 %v203, %v269
    %v271 = vpop.f32.mrf.mxu0
    %272 = vdwg.mxu0
    %v273 = vld [vmem:[#allocation2] sm:$0xff]
    %v274 = vld [vmem:[#allocation2 + $0x8] sm:$0xff]
    %v275 = vld [vmem:[#allocation2 + $0x10] sm:$0xf]
    %279 = vst [vmem:[#allocation1] ss:$2 sm:$0xff] %v273
    %s280 = scalar_lea.vmem [#allocation1], 16
    %281 = vst [vmem:[%s280] ss:$2 sm:$0xff] %v274
    %s282 = scalar_lea.vmem [#allocation1], 32
    %283 = vst [vmem:[%s282] ss:$2 sm:$0xff] %v275
    %v284 = vld.sshfl [vmem:[#allocation1] sm:$0xff pattern:$0x75316420]
    %v285 = vld.sshfl [vmem:[#allocation1 + $0x8] sm:$0xff pattern:$0x75316420]
    %v286 = vld.sshfl [vmem:[#allocation1 + $0x10] sm:$0xff pattern:$0x75316420]
    %v287 = vld.sshfl [vmem:[#allocation1 + $0x18] sm:$0xff pattern:$0x75316420]
    %v288 = vld.sshfl [vmem:[#allocation1 + $0x20] sm:$0xff pattern:$0x75316420]
    %v294 = vpack.c.bf16 %v284, %v284
    %v295 = vpack.c.bf16 %v285, %v285
    %v296 = vpack.c.bf16 %v286, %v286
    %v297 = vpack.c.bf16 %v287, %v287
    %v298 = vpack.c.bf16 %v288, %v288
    %299 = vrot.lane.b32.xlu0 %v87, 120
    %v300 = vpop.permute.xlu0 %299
    %306 = vrot.lane.b32.xlu0 %v294, 126
    %v307 = vpop.permute.xlu0 %306
    %308 = vrot.lane.b32.xlu0 %v295, 126
    %v309 = vpop.permute.xlu0 %308
    %310 = vrot.lane.b32.xlu0 %v296, 126
    %v311 = vpop.permute.xlu0 %310
    %312 = vrot.lane.b32.xlu0 %v297, 126
    %v313 = vpop.permute.xlu0 %312
    %314 = vrot.lane.b32.xlu0 %v298, 126
    %v315 = vpop.permute.xlu0 %314
    %vm316 = vcmask 1031168
    %v317 = vsel %vm316, %v307, %v309
    %v318 = vsel %vm316, %v309, %v311
    %v319 = vsel %vm316, %v311, %v313
    %v320 = vsel %vm316, %v313, %v315
    %v322 = vsel %vm137, %v300, 0
    %v325 = vsel %vm141, %v317, 0
    %v328 = vsel %vm141, %v318, 0
    %v331 = vsel %vm141, %v319, 0
    %v334 = vsel %vm141, %v320, 0
    %336 = vmatpush.bf16.msra.mxu0 0
    %337 = vmatpush.bf16.msra.mxu0 0
    %338 = vmatpush.bf16.msra.mxu0 0
    %339 = vmatpush.bf16.msra.mxu0 0
    %340 = vmatpush.bf16.msra.mxu0 0
    %341 = vmatpush.bf16.msra.mxu0 0
    %342 = vmatpush.bf16.msra.mxu0 0
    %343 = vmatpush.bf16.msra.mxu0 %v325
    %344 = vmatmul.bf16.gmra.mxu0 %v322
    %v345 = vpop.f32.mrf.mxu0
    %v346 = vadd.f32 0.0, %v345
    %v347 = vpop.f32.mrf.mxu0
    %348 = vdwg.mxu0
    %349 = vmatpush.bf16.msra.mxu0 0
    %350 = vmatpush.bf16.msra.mxu0 0
    %351 = vmatpush.bf16.msra.mxu0 0
    %352 = vmatpush.bf16.msra.mxu0 0
    %353 = vmatpush.bf16.msra.mxu0 0
    %354 = vmatpush.bf16.msra.mxu0 0
    %355 = vmatpush.bf16.msra.mxu0 0
    %356 = vmatpush.bf16.msra.mxu0 %v328
    %357 = vmatmul.bf16.gmra.mxu0 %v322
    %v358 = vpop.f32.mrf.mxu0
    %v359 = vadd.f32 0.0, %v358
    %v360 = vpop.f32.mrf.mxu0
    %361 = vdwg.mxu0
    %362 = vmatpush.bf16.msra.mxu0 0
    %363 = vmatpush.bf16.msra.mxu0 0
    %364 = vmatpush.bf16.msra.mxu0 0
    %365 = vmatpush.bf16.msra.mxu0 0
    %366 = vmatpush.bf16.msra.mxu0 0
    %367 = vmatpush.bf16.msra.mxu0 0
    %368 = vmatpush.bf16.msra.mxu0 0
    %369 = vmatpush.bf16.msra.mxu0 %v331
    %370 = vmatmul.bf16.gmra.mxu0 %v322
    %v371 = vpop.f32.mrf.mxu0
    %v372 = vadd.f32 0.0, %v371
    %v373 = vpop.f32.mrf.mxu0
    %374 = vdwg.mxu0
    %375 = vmatpush.bf16.msra.mxu0 0
    %376 = vmatpush.bf16.msra.mxu0 0
    %377 = vmatpush.bf16.msra.mxu0 0
    %378 = vmatpush.bf16.msra.mxu0 0
    %379 = vmatpush.bf16.msra.mxu0 0
    %380 = vmatpush.bf16.msra.mxu0 0
    %381 = vmatpush.bf16.msra.mxu0 0
    %382 = vmatpush.bf16.msra.mxu0 %v334
    %383 = vmatmul.bf16.gmra.mxu0 %v322
    %v384 = vpop.f32.mrf.mxu0
    %v385 = vadd.f32 0.0, %v384
    %v386 = vpop.f32.mrf.mxu0
    %387 = vdwg.mxu0
    %v388 = vadd.f32 %v231, %v346
    %v389 = vadd.f32 %v244, %v359
    %v390 = vadd.f32 %v257, %v372
    %v391 = vadd.f32 %v270, %v385
    %v392 = vld [vmem:[#allocation2] sm:$0xff]
    %v393 = vld [vmem:[#allocation2 + $0x8] sm:$0xff]
    %v394 = vld [vmem:[#allocation2 + $0x10] sm:$0xf]
    %398 = vst [vmem:[#allocation1] ss:$2 sm:$0xff] %v392
    %s399 = scalar_lea.vmem [#allocation1], 16
    %400 = vst [vmem:[%s399] ss:$2 sm:$0xff] %v393
    %s401 = scalar_lea.vmem [#allocation1], 32
    %402 = vst [vmem:[%s401] ss:$2 sm:$0xff] %v394
    %v403 = vld.sshfl [vmem:[#allocation1] sm:$0xff pattern:$0x75316420]
    %v404 = vld.sshfl [vmem:[#allocation1 + $0x8] sm:$0xff pattern:$0x75316420]
    %v405 = vld.sshfl [vmem:[#allocation1 + $0x10] sm:$0xff pattern:$0x75316420]
    %v406 = vld.sshfl [vmem:[#allocation1 + $0x18] sm:$0xff pattern:$0x75316420]
    %v407 = vld.sshfl [vmem:[#allocation1 + $0x20] sm:$0xff pattern:$0x75316420]
    %v413 = vpack.c.bf16 %v403, %v403
    %v414 = vpack.c.bf16 %v404, %v404
    %v415 = vpack.c.bf16 %v405, %v405
    %v416 = vpack.c.bf16 %v406, %v406
    %v417 = vpack.c.bf16 %v407, %v407
    %418 = vrot.lane.b32.xlu0 %v87, 116
    %v419 = vpop.permute.xlu0 %418
    %425 = vrot.lane.b32.xlu0 %v413, 112
    %v426 = vpop.permute.xlu0 %425
    %427 = vrot.lane.b32.xlu0 %v414, 112
    %v428 = vpop.permute.xlu0 %427
    %429 = vrot.lane.b32.xlu0 %v415, 112
    %v430 = vpop.permute.xlu0 %429
    %431 = vrot.lane.b32.xlu0 %v416, 112
    %v432 = vpop.permute.xlu0 %431
    %433 = vrot.lane.b32.xlu0 %v417, 112
    %v434 = vpop.permute.xlu0 %433
    %vm435 = vcmask 916480
    %v436 = vsel %vm435, %v426, %v428
    %v437 = vsel %vm435, %v428, %v430
    %v438 = vsel %vm435, %v430, %v432
    %v439 = vsel %vm435, %v432, %v434
    %v441 = vsel %vm137, %v419, 0
    %v444 = vsel %vm141, %v436, 0
    %v447 = vsel %vm141, %v437, 0
    %v450 = vsel %vm141, %v438, 0
    %v453 = vsel %vm141, %v439, 0
    %455 = vmatpush.bf16.msra.mxu0 0
    %456 = vmatpush.bf16.msra.mxu0 0
    %457 = vmatpush.bf16.msra.mxu0 0
    %458 = vmatpush.bf16.msra.mxu0 0
    %459 = vmatpush.bf16.msra.mxu0 0
    %460 = vmatpush.bf16.msra.mxu0 0
    %461 = vmatpush.bf16.msra.mxu0 0
    %462 = vmatpush.bf16.msra.mxu0 %v444
    %463 = vmatmul.bf16.gmra.mxu0 %v441
    %v464 = vpop.f32.mrf.mxu0
    %v465 = vadd.f32 0.0, %v464
    %v466 = vpop.f32.mrf.mxu0
    %467 = vdwg.mxu0
    %468 = vmatpush.bf16.msra.mxu0 0
    %469 = vmatpush.bf16.msra.mxu0 0
    %470 = vmatpush.bf16.msra.mxu0 0
    %471 = vmatpush.bf16.msra.mxu0 0
    %472 = vmatpush.bf16.msra.mxu0 0
    %473 = vmatpush.bf16.msra.mxu0 0
    %474 = vmatpush.bf16.msra.mxu0 0
    %475 = vmatpush.bf16.msra.mxu0 %v447
    %476 = vmatmul.bf16.gmra.mxu0 %v441
    %v477 = vpop.f32.mrf.mxu0
    %v478 = vadd.f32 0.0, %v477
    %v479 = vpop.f32.mrf.mxu0
    %480 = vdwg.mxu0
    %481 = vmatpush.bf16.msra.mxu0 0
    %482 = vmatpush.bf16.msra.mxu0 0
    %483 = vmatpush.bf16.msra.mxu0 0
    %484 = vmatpush.bf16.msra.mxu0 0
    %485 = vmatpush.bf16.msra.mxu0 0
    %486 = vmatpush.bf16.msra.mxu0 0
    %487 = vmatpush.bf16.msra.mxu0 0
    %488 = vmatpush.bf16.msra.mxu0 %v450
    %489 = vmatmul.bf16.gmra.mxu0 %v441
    %v490 = vpop.f32.mrf.mxu0
    %v491 = vadd.f32 0.0, %v490
    %v492 = vpop.f32.mrf.mxu0
    %493 = vdwg.mxu0
    %494 = vmatpush.bf16.msra.mxu0 0
    %495 = vmatpush.bf16.msra.mxu0 0
    %496 = vmatpush.bf16.msra.mxu0 0
    %497 = vmatpush.bf16.msra.mxu0 0
    %498 = vmatpush.bf16.msra.mxu0 0
    %499 = vmatpush.bf16.msra.mxu0 0
    %500 = vmatpush.bf16.msra.mxu0 0
    %501 = vmatpush.bf16.msra.mxu0 %v453
    %502 = vmatmul.bf16.gmra.mxu0 %v441
    %v503 = vpop.f32.mrf.mxu0
    %v504 = vadd.f32 0.0, %v503
    %v505 = vpop.f32.mrf.mxu0
    %506 = vdwg.mxu0
    %v507 = vadd.f32 %v388, %v465
    %v508 = vadd.f32 %v389, %v478
    %v509 = vadd.f32 %v390, %v491
    %v510 = vadd.f32 %v391, %v504
    %v511 = vld [vmem:[#allocation2] sm:$0xff]
    %v512 = vld [vmem:[#allocation2 + $0x8] sm:$0xff]
    %v513 = vld [vmem:[#allocation2 + $0x10] sm:$0xf]
    %517 = vst [vmem:[#allocation1] ss:$2 sm:$0xff] %v511
    %s518 = scalar_lea.vmem [#allocation1], 16
    %519 = vst [vmem:[%s518] ss:$2 sm:$0xff] %v512
    %s520 = scalar_lea.vmem [#allocation1], 32
    %521 = vst [vmem:[%s520] ss:$2 sm:$0xff] %v513
    %v522 = vld.sshfl [vmem:[#allocation1] sm:$0xff pattern:$0x75316420]
    %v523 = vld.sshfl [vmem:[#allocation1 + $0x8] sm:$0xff pattern:$0x75316420]
    %v524 = vld.sshfl [vmem:[#allocation1 + $0x10] sm:$0xff pattern:$0x75316420]
    %v525 = vld.sshfl [vmem:[#allocation1 + $0x18] sm:$0xff pattern:$0x75316420]
    %v526 = vld.sshfl [vmem:[#allocation1 + $0x20] sm:$0xff pattern:$0x75316420]
    %v532 = vpack.c.bf16 %v522, %v522
    %v533 = vpack.c.bf16 %v523, %v523
    %v534 = vpack.c.bf16 %v524, %v524
    %v535 = vpack.c.bf16 %v525, %v525
    %v536 = vpack.c.bf16 %v526, %v526
    %537 = vrot.lane.b32.xlu0 %v87, 112
    %v538 = vpop.permute.xlu0 %537
    %544 = vrot.lane.b32.xlu0 %v532, 111
    %v545 = vpop.permute.xlu0 %544
    %546 = vrot.lane.b32.xlu0 %v533, 111
    %v547 = vpop.permute.xlu0 %546
    %548 = vrot.lane.b32.xlu0 %v534, 111
    %v549 = vpop.permute.xlu0 %548
    %550 = vrot.lane.b32.xlu0 %v535, 111
    %v551 = vpop.permute.xlu0 %550
    %552 = vrot.lane.b32.xlu0 %v536, 111
    %v553 = vpop.permute.xlu0 %552
    %vm554 = vcmask 908288
    %v555 = vsel %vm554, %v545, %v547
    %v556 = vsel %vm554, %v547, %v549
    %v557 = vsel %vm554, %v549, %v551
    %v558 = vsel %vm554, %v551, %v553
    %v560 = vsel %vm137, %v538, 0
    %v563 = vsel %vm141, %v555, 0
    %v566 = vsel %vm141, %v556, 0
    %v569 = vsel %vm141, %v557, 0
    %v572 = vsel %vm141, %v558, 0
    %574 = vmatpush.bf16.msra.mxu0 0
    %575 = vmatpush.bf16.msra.mxu0 0
    %576 = vmatpush.bf16.msra.mxu0 0
    %577 = vmatpush.bf16.msra.mxu0 0
    %578 = vmatpush.bf16.msra.mxu0 0
    %579 = vmatpush.bf16.msra.mxu0 0
    %580 = vmatpush.bf16.msra.mxu0 0
    %581 = vmatpush.bf16.msra.mxu0 %v563
    %582 = vmatmul.bf16.gmra.mxu0 %v560
    %v583 = vpop.f32.mrf.mxu0
    %v584 = vadd.f32 0.0, %v583
    %v585 = vpop.f32.mrf.mxu0
    %586 = vdwg.mxu0
    %587 = vmatpush.bf16.msra.mxu0 0
    %588 = vmatpush.bf16.msra.mxu0 0
    %589 = vmatpush.bf16.msra.mxu0 0
    %590 = vmatpush.bf16.msra.mxu0 0
    %591 = vmatpush.bf16.msra.mxu0 0
    %592 = vmatpush.bf16.msra.mxu0 0
    %593 = vmatpush.bf16.msra.mxu0 0
    %594 = vmatpush.bf16.msra.mxu0 %v566
    %595 = vmatmul.bf16.gmra.mxu0 %v560
    %v596 = vpop.f32.mrf.mxu0
    %v597 = vadd.f32 0.0, %v596
    %v598 = vpop.f32.mrf.mxu0
    %599 = vdwg.mxu0
    %600 = vmatpush.bf16.msra.mxu0 0
    %601 = vmatpush.bf16.msra.mxu0 0
    %602 = vmatpush.bf16.msra.mxu0 0
    %603 = vmatpush.bf16.msra.mxu0 0
    %604 = vmatpush.bf16.msra.mxu0 0
    %605 = vmatpush.bf16.msra.mxu0 0
    %606 = vmatpush.bf16.msra.mxu0 0
    %607 = vmatpush.bf16.msra.mxu0 %v569
    %608 = vmatmul.bf16.gmra.mxu0 %v560
    %v609 = vpop.f32.mrf.mxu0
    %v610 = vadd.f32 0.0, %v609
    %v611 = vpop.f32.mrf.mxu0
    %612 = vdwg.mxu0
    %613 = vmatpush.bf16.msra.mxu0 0
    %614 = vmatpush.bf16.msra.mxu0 0
    %615 = vmatpush.bf16.msra.mxu0 0
    %616 = vmatpush.bf16.msra.mxu0 0
    %617 = vmatpush.bf16.msra.mxu0 0
    %618 = vmatpush.bf16.msra.mxu0 0
    %619 = vmatpush.bf16.msra.mxu0 0
    %620 = vmatpush.bf16.msra.mxu0 %v572
    %621 = vmatmul.bf16.gmra.mxu0 %v560
    %v622 = vpop.f32.mrf.mxu0
    %v623 = vadd.f32 0.0, %v622
    %v624 = vpop.f32.mrf.mxu0
    %625 = vdwg.mxu0
    %v626 = vadd.f32 %v507, %v584
    %v627 = vadd.f32 %v508, %v597
    %v628 = vadd.f32 %v509, %v610
    %v629 = vadd.f32 %v510, %v623
    %v630 = vld [vmem:[#allocation2] sm:$0xff]
    %v631 = vld [vmem:[#allocation2 + $0x8] sm:$0xff]
    %v632 = vld [vmem:[#allocation2 + $0x10] sm:$0xf]
    %636 = vst [vmem:[#allocation1] ss:$2 sm:$0xff] %v630
    %s637 = scalar_lea.vmem [#allocation1], 16
    %638 = vst [vmem:[%s637] ss:$2 sm:$0xff] %v631
    %s639 = scalar_lea.vmem [#allocation1], 32
    %640 = vst [vmem:[%s639] ss:$2 sm:$0xff] %v632
    %v641 = vld.sshfl [vmem:[#allocation1] sm:$0xff pattern:$0x75316420]
    %v642 = vld.sshfl [vmem:[#allocation1 + $0x8] sm:$0xff pattern:$0x75316420]
    %v643 = vld.sshfl [vmem:[#allocation1 + $0x10] sm:$0xff pattern:$0x75316420]
    %v644 = vld.sshfl [vmem:[#allocation1 + $0x18] sm:$0xff pattern:$0x75316420]
    %v645 = vld.sshfl [vmem:[#allocation1 + $0x20] sm:$0xff pattern:$0x75316420]
    %v651 = vpack.c.bf16 %v641, %v641
    %v652 = vpack.c.bf16 %v642, %v642
    %v653 = vpack.c.bf16 %v643, %v643
    %v654 = vpack.c.bf16 %v644, %v644
    %v655 = vpack.c.bf16 %v645, %v645
    %656 = vrot.lane.b32.xlu0 %v87, 108
    %v657 = vpop.permute.xlu0 %656
    %663 = vrot.lane.b32.xlu0 %v651, 110
    %v664 = vpop.permute.xlu0 %663
    %665 = vrot.lane.b32.xlu0 %v652, 110
    %v666 = vpop.permute.xlu0 %665
    %667 = vrot.lane.b32.xlu0 %v653, 110
    %v668 = vpop.permute.xlu0 %667
    %669 = vrot.lane.b32.xlu0 %v654, 110
    %v670 = vpop.permute.xlu0 %669
    %671 = vrot.lane.b32.xlu0 %v655, 110
    %v672 = vpop.permute.xlu0 %671
    %vm673 = vcmask 900096
    %v674 = vsel %vm673, %v664, %v666
    %v675 = vsel %vm673, %v666, %v668
    %v676 = vsel %vm673, %v668, %v670
    %v677 = vsel %vm673, %v670, %v672
    %v679 = vsel %vm137, %v657, 0
    %v682 = vsel %vm141, %v674, 0
    %v685 = vsel %vm141, %v675, 0
    %v688 = vsel %vm141, %v676, 0
    %v691 = vsel %vm141, %v677, 0
    %693 = vmatpush.bf16.msra.mxu0 0
    %694 = vmatpush.bf16.msra.mxu0 0
    %695 = vmatpush.bf16.msra.mxu0 0
    %696 = vmatpush.bf16.msra.mxu0 0
    %697 = vmatpush.bf16.msra.mxu0 0
    %698 = vmatpush.bf16.msra.mxu0 0
    %699 = vmatpush.bf16.msra.mxu0 0
    %700 = vmatpush.bf16.msra.mxu0 %v682
    %701 = vmatmul.bf16.gmra.mxu0 %v679
    %v702 = vpop.f32.mrf.mxu0
    %v703 = vadd.f32 0.0, %v702
    %v704 = vpop.f32.mrf.mxu0
    %705 = vdwg.mxu0
    %706 = vmatpush.bf16.msra.mxu0 0
    %707 = vmatpush.bf16.msra.mxu0 0
    %708 = vmatpush.bf16.msra.mxu0 0
    %709 = vmatpush.bf16.msra.mxu0 0
    %710 = vmatpush.bf16.msra.mxu0 0
    %711 = vmatpush.bf16.msra.mxu0 0
    %712 = vmatpush.bf16.msra.mxu0 0
    %713 = vmatpush.bf16.msra.mxu0 %v685
    %714 = vmatmul.bf16.gmra.mxu0 %v679
    %v715 = vpop.f32.mrf.mxu0
    %v716 = vadd.f32 0.0, %v715
    %v717 = vpop.f32.mrf.mxu0
    %718 = vdwg.mxu0
    %719 = vmatpush.bf16.msra.mxu0 0
    %720 = vmatpush.bf16.msra.mxu0 0
    %721 = vmatpush.bf16.msra.mxu0 0
    %722 = vmatpush.bf16.msra.mxu0 0
    %723 = vmatpush.bf16.msra.mxu0 0
    %724 = vmatpush.bf16.msra.mxu0 0
    %725 = vmatpush.bf16.msra.mxu0 0
    %726 = vmatpush.bf16.msra.mxu0 %v688
    %727 = vmatmul.bf16.gmra.mxu0 %v679
    %v728 = vpop.f32.mrf.mxu0
    %v729 = vadd.f32 0.0, %v728
    %v730 = vpop.f32.mrf.mxu0
    %731 = vdwg.mxu0
    %732 = vmatpush.bf16.msra.mxu0 0
    %733 = vmatpush.bf16.msra.mxu0 0
    %734 = vmatpush.bf16.msra.mxu0 0
    %735 = vmatpush.bf16.msra.mxu0 0
    %736 = vmatpush.bf16.msra.mxu0 0
    %737 = vmatpush.bf16.msra.mxu0 0
    %738 = vmatpush.bf16.msra.mxu0 0
    %739 = vmatpush.bf16.msra.mxu0 %v691
    %740 = vmatmul.bf16.gmra.mxu0 %v679
    %v741 = vpop.f32.mrf.mxu0
    %v742 = vadd.f32 0.0, %v741
    %v743 = vpop.f32.mrf.mxu0
    %744 = vdwg.mxu0
    %v745 = vadd.f32 %v626, %v703
    %v746 = vadd.f32 %v627, %v716
    %v747 = vadd.f32 %v628, %v729
    %v748 = vadd.f32 %v629, %v742
    %v749 = vld [vmem:[#allocation2] sm:$0xff]
    %v750 = vld [vmem:[#allocation2 + $0x8] sm:$0xff]
    %v751 = vld [vmem:[#allocation2 + $0x10] sm:$0xf]
    %755 = vst [vmem:[#allocation1] ss:$2 sm:$0xff] %v749
    %s756 = scalar_lea.vmem [#allocation1], 16
    %757 = vst [vmem:[%s756] ss:$2 sm:$0xff] %v750
    %s758 = scalar_lea.vmem [#allocation1], 32
    %759 = vst [vmem:[%s758] ss:$2 sm:$0xff] %v751
    %v760 = vld.sshfl [vmem:[#allocation1] sm:$0xff pattern:$0x75316420]
    %v761 = vld.sshfl [vmem:[#allocation1 + $0x8] sm:$0xff pattern:$0x75316420]
    %v762 = vld.sshfl [vmem:[#allocation1 + $0x10] sm:$0xff pattern:$0x75316420]
    %v763 = vld.sshfl [vmem:[#allocation1 + $0x18] sm:$0xff pattern:$0x75316420]
    %v764 = vld.sshfl [vmem:[#allocation1 + $0x20] sm:$0xff pattern:$0x75316420]
    %v770 = vpack.c.bf16 %v760, %v760
    %v771 = vpack.c.bf16 %v761, %v761
    %v772 = vpack.c.bf16 %v762, %v762
    %v773 = vpack.c.bf16 %v763, %v763
    %v774 = vpack.c.bf16 %v764, %v764
    %775 = vrot.lane.b32.xlu0 %v87, 104
    %v776 = vpop.permute.xlu0 %775
    %782 = vrot.lane.b32.xlu0 %v770, 96
    %v783 = vpop.permute.xlu0 %782
    %784 = vrot.lane.b32.xlu0 %v771, 96
    %v785 = vpop.permute.xlu0 %784
    %786 = vrot.lane.b32.xlu0 %v772, 96
    %v787 = vpop.permute.xlu0 %786
    %788 = vrot.lane.b32.xlu0 %v773, 96
    %v789 = vpop.permute.xlu0 %788
    %790 = vrot.lane.b32.xlu0 %v774, 96
    %v791 = vpop.permute.xlu0 %790
    %vm792 = vcmask 785408
    %v793 = vsel %vm792, %v783, %v785
    %v794 = vsel %vm792, %v785, %v787
    %v795 = vsel %vm792, %v787, %v789
    %v796 = vsel %vm792, %v789, %v791
    %v798 = vsel %vm137, %v776, 0
    %v801 = vsel %vm141, %v793, 0
    %v804 = vsel %vm141, %v794, 0
    %v807 = vsel %vm141, %v795, 0
    %v810 = vsel %vm141, %v796, 0
    %812 = vmatpush.bf16.msra.mxu0 0
    %813 = vmatpush.bf16.msra.mxu0 0
    %814 = vmatpush.bf16.msra.mxu0 0
    %815 = vmatpush.bf16.msra.mxu0 0
    %816 = vmatpush.bf16.msra.mxu0 0
    %817 = vmatpush.bf16.msra.mxu0 0
    %818 = vmatpush.bf16.msra.mxu0 0
    %819 = vmatpush.bf16.msra.mxu0 %v801
    %820 = vmatmul.bf16.gmra.mxu0 %v798
    %v821 = vpop.f32.mrf.mxu0
    %v822 = vadd.f32 0.0, %v821
    %v823 = vpop.f32.mrf.mxu0
    %824 = vdwg.mxu0
    %825 = vmatpush.bf16.msra.mxu0 0
    %826 = vmatpush.bf16.msra.mxu0 0
    %827 = vmatpush.bf16.msra.mxu0 0
    %828 = vmatpush.bf16.msra.mxu0 0
    %829 = vmatpush.bf16.msra.mxu0 0
    %830 = vmatpush.bf16.msra.mxu0 0
    %831 = vmatpush.bf16.msra.mxu0 0
    %832 = vmatpush.bf16.msra.mxu0 %v804
    %833 = vmatmul.bf16.gmra.mxu0 %v798
    %v834 = vpop.f32.mrf.mxu0
    %v835 = vadd.f32 0.0, %v834
    %v836 = vpop.f32.mrf.mxu0
    %837 = vdwg.mxu0
    %838 = vmatpush.bf16.msra.mxu0 0
    %839 = vmatpush.bf16.msra.mxu0 0
    %840 = vmatpush.bf16.msra.mxu0 0
    %841 = vmatpush.bf16.msra.mxu0 0
    %842 = vmatpush.bf16.msra.mxu0 0
    %843 = vmatpush.bf16.msra.mxu0 0
    %844 = vmatpush.bf16.msra.mxu0 0
    %845 = vmatpush.bf16.msra.mxu0 %v807
    %846 = vmatmul.bf16.gmra.mxu0 %v798
    %v847 = vpop.f32.mrf.mxu0
    %v848 = vadd.f32 0.0, %v847
    %v849 = vpop.f32.mrf.mxu0
    %850 = vdwg.mxu0
    %851 = vmatpush.bf16.msra.mxu0 0
    %852 = vmatpush.bf16.msra.mxu0 0
    %853 = vmatpush.bf16.msra.mxu0 0
    %854 = vmatpush.bf16.msra.mxu0 0
    %855 = vmatpush.bf16.msra.mxu0 0
    %856 = vmatpush.bf16.msra.mxu0 0
    %857 = vmatpush.bf16.msra.mxu0 0
    %858 = vmatpush.bf16.msra.mxu0 %v810
    %859 = vmatmul.bf16.gmra.mxu0 %v798
    %v860 = vpop.f32.mrf.mxu0
    %v861 = vadd.f32 0.0, %v860
    %v862 = vpop.f32.mrf.mxu0
    %863 = vdwg.mxu0
    %v864 = vadd.f32 %v745, %v822
    %v865 = vadd.f32 %v746, %v835
    %v866 = vadd.f32 %v747, %v848
    %v867 = vadd.f32 %v748, %v861
    %v868 = vld [vmem:[#allocation2] sm:$0xff]
    %v869 = vld [vmem:[#allocation2 + $0x8] sm:$0xff]
    %v870 = vld [vmem:[#allocation2 + $0x10] sm:$0xf]
    %874 = vst [vmem:[#allocation1] ss:$2 sm:$0xff] %v868
    %s875 = scalar_lea.vmem [#allocation1], 16
    %876 = vst [vmem:[%s875] ss:$2 sm:$0xff] %v869
    %s877 = scalar_lea.vmem [#allocation1], 32
    %878 = vst [vmem:[%s877] ss:$2 sm:$0xff] %v870
    %v879 = vld.sshfl [vmem:[#allocation1] sm:$0xff pattern:$0x75316420]
    %v880 = vld.sshfl [vmem:[#allocation1 + $0x8] sm:$0xff pattern:$0x75316420]
    %v881 = vld.sshfl [vmem:[#allocation1 + $0x10] sm:$0xff pattern:$0x75316420]
    %v882 = vld.sshfl [vmem:[#allocation1 + $0x18] sm:$0xff pattern:$0x75316420]
    %v883 = vld.sshfl [vmem:[#allocation1 + $0x20] sm:$0xff pattern:$0x75316420]
    %v889 = vpack.c.bf16 %v879, %v879
    %v890 = vpack.c.bf16 %v880, %v880
    %v891 = vpack.c.bf16 %v881, %v881
    %v892 = vpack.c.bf16 %v882, %v882
    %v893 = vpack.c.bf16 %v883, %v883
    %894 = vrot.lane.b32.xlu0 %v87, 100
    %v895 = vpop.permute.xlu0 %894
    %901 = vrot.lane.b32.xlu0 %v889, 95
    %v902 = vpop.permute.xlu0 %901
    %903 = vrot.lane.b32.xlu0 %v890, 95
    %v904 = vpop.permute.xlu0 %903
    %905 = vrot.lane.b32.xlu0 %v891, 95
    %v906 = vpop.permute.xlu0 %905
    %907 = vrot.lane.b32.xlu0 %v892, 95
    %v908 = vpop.permute.xlu0 %907
    %909 = vrot.lane.b32.xlu0 %v893, 95
    %v910 = vpop.permute.xlu0 %909
    %vm911 = vcmask 777216
    %v912 = vsel %vm911, %v902, %v904
    %v913 = vsel %vm911, %v904, %v906
    %v914 = vsel %vm911, %v906, %v908
    %v915 = vsel %vm911, %v908, %v910
    %v917 = vsel %vm137, %v895, 0
    %v920 = vsel %vm141, %v912, 0
    %v923 = vsel %vm141, %v913, 0
    %v926 = vsel %vm141, %v914, 0
    %v929 = vsel %vm141, %v915, 0
    %931 = vmatpush.bf16.msra.mxu0 0
    %932 = vmatpush.bf16.msra.mxu0 0
    %933 = vmatpush.bf16.msra.mxu0 0
    %934 = vmatpush.bf16.msra.mxu0 0
    %935 = vmatpush.bf16.msra.mxu0 0
    %936 = vmatpush.bf16.msra.mxu0 0
    %937 = vmatpush.bf16.msra.mxu0 0
    %938 = vmatpush.bf16.msra.mxu0 %v920
    %939 = vmatmul.bf16.gmra.mxu0 %v917
    %v940 = vpop.f32.mrf.mxu0
    %v941 = vadd.f32 0.0, %v940
    %v942 = vpop.f32.mrf.mxu0
    %943 = vdwg.mxu0
    %944 = vmatpush.bf16.msra.mxu0 0
    %945 = vmatpush.bf16.msra.mxu0 0
    %946 = vmatpush.bf16.msra.mxu0 0
    %947 = vmatpush.bf16.msra.mxu0 0
    %948 = vmatpush.bf16.msra.mxu0 0
    %949 = vmatpush.bf16.msra.mxu0 0
    %950 = vmatpush.bf16.msra.mxu0 0
    %951 = vmatpush.bf16.msra.mxu0 %v923
    %952 = vmatmul.bf16.gmra.mxu0 %v917
    %v953 = vpop.f32.mrf.mxu0
    %v954 = vadd.f32 0.0, %v953
    %v955 = vpop.f32.mrf.mxu0
    %956 = vdwg.mxu0
    %957 = vmatpush.bf16.msra.mxu0 0
    %958 = vmatpush.bf16.msra.mxu0 0
    %959 = vmatpush.bf16.msra.mxu0 0
    %960 = vmatpush.bf16.msra.mxu0 0
    %961 = vmatpush.bf16.msra.mxu0 0
    %962 = vmatpush.bf16.msra.mxu0 0
    %963 = vmatpush.bf16.msra.mxu0 0
    %964 = vmatpush.bf16.msra.mxu0 %v926
    %965 = vmatmul.bf16.gmra.mxu0 %v917
    %v966 = vpop.f32.mrf.mxu0
    %v967 = vadd.f32 0.0, %v966
    %v968 = vpop.f32.mrf.mxu0
    %969 = vdwg.mxu0
    %970 = vmatpush.bf16.msra.mxu0 0
    %971 = vmatpush.bf16.msra.mxu0 0
    %972 = vmatpush.bf16.msra.mxu0 0
    %973 = vmatpush.bf16.msra.mxu0 0
    %974 = vmatpush.bf16.msra.mxu0 0
    %975 = vmatpush.bf16.msra.mxu0 0
    %976 = vmatpush.bf16.msra.mxu0 0
    %977 = vmatpush.bf16.msra.mxu0 %v929
    %978 = vmatmul.bf16.gmra.mxu0 %v917
    %v979 = vpop.f32.mrf.mxu0
    %v980 = vadd.f32 0.0, %v979
    %v981 = vpop.f32.mrf.mxu0
    %982 = vdwg.mxu0
    %v983 = vadd.f32 %v864, %v941
    %v984 = vadd.f32 %v865, %v954
    %v985 = vadd.f32 %v866, %v967
    %v986 = vadd.f32 %v867, %v980
    %v987 = vld [vmem:[#allocation2] sm:$0xff]
    %v988 = vld [vmem:[#allocation2 + $0x8] sm:$0xff]
    %v989 = vld [vmem:[#allocation2 + $0x10] sm:$0xf]
    %993 = vst [vmem:[#allocation1] ss:$2 sm:$0xff] %v987
    %s994 = scalar_lea.vmem [#allocation1], 16
    %995 = vst [vmem:[%s994] ss:$2 sm:$0xff] %v988
    %s996 = scalar_lea.vmem [#allocation1], 32
    %997 = vst [vmem:[%s996] ss:$2 sm:$0xff] %v989
    %v998 = vld.sshfl [vmem:[#allocation1] sm:$0xff pattern:$0x75316420]
    %v999 = vld.sshfl [vmem:[#allocation1 + $0x8] sm:$0xff pattern:$0x75316420]
    %v1000 = vld.sshfl [vmem:[#allocation1 + $0x10] sm:$0xff pattern:$0x75316420]
    %v1001 = vld.sshfl [vmem:[#allocation1 + $0x18] sm:$0xff pattern:$0x75316420]
    %v1002 = vld.sshfl [vmem:[#allocation1 + $0x20] sm:$0xff pattern:$0x75316420]
    %v1008 = vpack.c.bf16 %v998, %v998
    %v1009 = vpack.c.bf16 %v999, %v999
    %v1010 = vpack.c.bf16 %v1000, %v1000
    %v1011 = vpack.c.bf16 %v1001, %v1001
    %v1012 = vpack.c.bf16 %v1002, %v1002
    %1013 = vrot.lane.b32.xlu0 %v87, 96
    %v1014 = vpop.permute.xlu0 %1013
    %1020 = vrot.lane.b32.xlu0 %v1008, 94
    %v1021 = vpop.permute.xlu0 %1020
    %1022 = vrot.lane.b32.xlu0 %v1009, 94
    %v1023 = vpop.permute.xlu0 %1022
    %1024 = vrot.lane.b32.xlu0 %v1010, 94
    %v1025 = vpop.permute.xlu0 %1024
    %1026 = vrot.lane.b32.xlu0 %v1011, 94
    %v1027 = vpop.permute.xlu0 %1026
    %1028 = vrot.lane.b32.xlu0 %v1012, 94
    %v1029 = vpop.permute.xlu0 %1028
    %vm1030 = vcmask 769024
    %v1031 = vsel %vm1030, %v1021, %v1023
    %v1032 = vsel %vm1030, %v1023, %v1025
    %v1033 = vsel %vm1030, %v1025, %v1027
    %v1034 = vsel %vm1030, %v1027, %v1029
    %v1036 = vsel %vm137, %v1014, 0
    %v1039 = vsel %vm141, %v1031, 0
    %v1042 = vsel %vm141, %v1032, 0
    %v1045 = vsel %vm141, %v1033, 0
    %v1048 = vsel %vm141, %v1034, 0
    %1050 = vmatpush.bf16.msra.mxu0 0
    %1051 = vmatpush.bf16.msra.mxu0 0
    %1052 = vmatpush.bf16.msra.mxu0 0
    %1053 = vmatpush.bf16.msra.mxu0 0
    %1054 = vmatpush.bf16.msra.mxu0 0
    %1055 = vmatpush.bf16.msra.mxu0 0
    %1056 = vmatpush.bf16.msra.mxu0 0
    %1057 = vmatpush.bf16.msra.mxu0 %v1039
    %1058 = vmatmul.bf16.gmra.mxu0 %v1036
    %v1059 = vpop.f32.mrf.mxu0
    %v1060 = vadd.f32 0.0, %v1059
    %v1061 = vpop.f32.mrf.mxu0
    %1062 = vdwg.mxu0
    %1063 = vmatpush.bf16.msra.mxu0 0
    %1064 = vmatpush.bf16.msra.mxu0 0
    %1065 = vmatpush.bf16.msra.mxu0 0
    %1066 = vmatpush.bf16.msra.mxu0 0
    %1067 = vmatpush.bf16.msra.mxu0 0
    %1068 = vmatpush.bf16.msra.mxu0 0
    %1069 = vmatpush.bf16.msra.mxu0 0
    %1070 = vmatpush.bf16.msra.mxu0 %v1042
    %1071 = vmatmul.bf16.gmra.mxu0 %v1036
    %v1072 = vpop.f32.mrf.mxu0
    %v1073 = vadd.f32 0.0, %v1072
    %v1074 = vpop.f32.mrf.mxu0
    %1075 = vdwg.mxu0
    %1076 = vmatpush.bf16.msra.mxu0 0
    %1077 = vmatpush.bf16.msra.mxu0 0
    %1078 = vmatpush.bf16.msra.mxu0 0
    %1079 = vmatpush.bf16.msra.mxu0 0
    %1080 = vmatpush.bf16.msra.mxu0 0
    %1081 = vmatpush.bf16.msra.mxu0 0
    %1082 = vmatpush.bf16.msra.mxu0 0
    %1083 = vmatpush.bf16.msra.mxu0 %v1045
    %1084 = vmatmul.bf16.gmra.mxu0 %v1036
    %v1085 = vpop.f32.mrf.mxu0
    %v1086 = vadd.f32 0.0, %v1085
    %v1087 = vpop.f32.mrf.mxu0
    %1088 = vdwg.mxu0
    %1089 = vmatpush.bf16.msra.mxu0 0
    %1090 = vmatpush.bf16.msra.mxu0 0
    %1091 = vmatpush.bf16.msra.mxu0 0
    %1092 = vmatpush.bf16.msra.mxu0 0
    %1093 = vmatpush.bf16.msra.mxu0 0
    %1094 = vmatpush.bf16.msra.mxu0 0
    %1095 = vmatpush.bf16.msra.mxu0 0
    %1096 = vmatpush.bf16.msra.mxu0 %v1048
    %1097 = vmatmul.bf16.gmra.mxu0 %v1036
    %v1098 = vpop.f32.mrf.mxu0
    %v1099 = vadd.f32 0.0, %v1098
    %v1100 = vpop.f32.mrf.mxu0
    %1101 = vdwg.mxu0
    %v1102 = vadd.f32 %v983, %v1060
    %v1103 = vadd.f32 %v984, %v1073
    %v1104 = vadd.f32 %v985, %v1086
    %v1105 = vadd.f32 %v986, %v1099
    %1106 = vset.pattern.permute.xlu0 2
    %1107 = vperm.xlu0 %1106, %v51
    %v1108 = vpop.permute.xlu0 %1107
    %v1110 = vmul.f32 %v1102, %v1108
    %v1111 = vmul.f32 %v1103, %v1108
    %v1112 = vmul.f32 %v1104, %v1108
    %v1113 = vmul.f32 %v1105, %v1108
    %1114 = vst [vmem:[#allocation6] sm:$0xff] %v1110
    %1115 = vst [vmem:[#allocation6 + $0x8] sm:$0xff] %v1111
    %1116 = vst [vmem:[#allocation6 + $0x10] sm:$0xff] %v1112
    %1117 = vst [vmem:[#allocation6 + $0x18] sm:$0xff] %v1113
    // Predicated region
    $region18: #{tpu_custom_call.1} parent=1 // pred_check
      _
    $region19: #{tpu_custom_call.1} parent=1 // pred_check_branch
      %1119 = sbr.rel (0) target = $region21
    $region20: #{tpu_custom_call.1} parent=1 // pred_region
      %1121 = vsyncadd [#allocation5], 0
      %s1123 = sshll.u32 [#allocation6], 4
      %s1124 = int_to_ptr.vmem [resolvable:$true] %s1123
      %s1125 = sshll.u32 %s3, 4
      %s1126 = int_to_ptr.hbm [resolvable:$true] %s1125
      %1128 = dma.vmem_to_hbm [thread:$0]  %s1124, 512, %s1126, [#allocation5]
    $region21: #{tpu_custom_call.1} parent=1 // pred_fallthru
      _
    // Predicated region
    $region22: #{tpu_custom_call.1} parent=1 // pred_check
      _
    $region23: #{tpu_custom_call.1} parent=1 // pred_check_branch
      %1130 = sbr.rel (0) target = $region25
    $region24: #{tpu_custom_call.1} parent=1 // pred_region
      %1132 = dma.done [#allocation5], 512
    $region25: #{tpu_custom_call.1} parent=1 // pred_fallthru
      _
    %1133 = vsyncpa [#allocation4], 1
    %1134 = vsyncpa [#allocation5], 1

</llo_original>
